<compile_context>
chip_gen: v7x
topology: tpu7x:2x2x1
jax: 0.10.0
libtpu: 0.0.40
codegen_flags: <defaults>
</compile_context>

<pallas_src>
import jax
import jax.numpy as jnp
from jax import lax
from jax.experimental import pallas as pl
from jax.experimental.pallas import tpu as pltpu


def _make_channel_attention_kernel(hw, t_hw, needs_mask):
    inv_hw = 1.0 / float(hw)
    n_folds = t_hw // 128

    def kernel(x_ref, w1_ref, w2_ref, o_ref, sum_ref, max_ref):
        # x_ref:   (C, T_HW)  spatial tile of one batch element (native dtype)
        # w1_ref:  (C_r, C)   fc1 1x1-conv weight, torch (out, in) layout, no bias
        # w2_ref:  (C, C_r)   fc2 1x1-conv weight
        # o_ref:   (C, 1)     sigmoid channel-attention weights for this batch elem
        # sum_ref: (C, 128)   f32 lane-wide running sum accumulator
        # max_ref: (C, 128)   f32 lane-wide running max accumulator
        k = pl.program_id(1)
        last = pl.num_programs(1) - 1

        @pl.when(k == 0)
        def _init():
            sum_ref[...] = jnp.zeros_like(sum_ref)
            max_ref[...] = jnp.full_like(max_ref, -jnp.inf)

        def accumulate(masked):
            # Fold the (C, T_HW) tile into (C, 128) partials with lane-aligned
            # static slices (VPU only), then update the scratch once.
            if masked:
                lane = lax.broadcasted_iota(jnp.int32, (1, 128), 1)
                base = k * t_hw
            s = None
            m = None
            for j in range(n_folds):
                sl = x_ref[:, j * 128:(j + 1) * 128].astype(jnp.float32)
                if masked:
                    valid = (lane + (base + j * 128)) < hw        # (1, 128)
                    sl_s = jnp.where(valid, sl, 0.0)
                    sl_m = jnp.where(valid, sl, -jnp.inf)
                else:
                    sl_s = sl
                    sl_m = sl
                s = sl_s if s is None else s + sl_s
                m = sl_m if m is None else jnp.maximum(m, sl_m)
            sum_ref[...] += s
            max_ref[...] = jnp.maximum(max_ref[...], m)

        if needs_mask:
            # Only the tail tile pays for the iota/compare/selects.
            @pl.when(k < last)
            def _steady():
                accumulate(masked=False)

            @pl.when(k == last)
            def _tail():
                accumulate(masked=True)
        else:
            accumulate(masked=False)

        @pl.when(k == last)
        def _finalize():
            # Single cross-lane reduce of the lane-wide accumulators.
            avg = jnp.sum(sum_ref[...], axis=-1, keepdims=True) * inv_hw  # (C, 1)
            mx = jnp.max(max_ref[...], axis=-1, keepdims=True)           # (C, 1)

            w1 = w1_ref[...]   # native dtype; MXU takes it directly
            w2 = w2_ref[...]

            h_avg = jnp.maximum(
                jnp.dot(w1, avg, preferred_element_type=jnp.float32), 0.0)  # (C_r, 1)
            h_max = jnp.maximum(
                jnp.dot(w1, mx, preferred_element_type=jnp.float32), 0.0)   # (C_r, 1)
            # fc2 is linear: fc2(h_avg) + fc2(h_max) == fc2(h_avg + h_max).
            out = jnp.dot(w2, h_avg + h_max,
                          preferred_element_type=jnp.float32)               # (C, 1)
            o_ref[...] = jax.nn.sigmoid(out).astype(o_ref.dtype)

    return kernel


def _choose_hw_tile(C, HW, itemsize, vmem_budget_bytes):
    """Largest multiple-of-128 spatial tile whose double-buffered input fits the
    VMEM budget, never larger than needed to cover HW."""
    max_t = vmem_budget_bytes // (2 * C * itemsize)
    max_t = max(128, (max_t // 128) * 128)
    if HW % 128 == 0:
        return min(max_t, HW)
    if HW < 128:
        return 128                       # single ragged tile; tail masked in-kernel
    return min(max_t, (HW // 128) * 128)  # tail tile masked in-kernel


def channel_attention(x, w_fc1, w_fc2, *, hw_tile=None,
                      vmem_budget_bytes=16 * 1024 * 1024):
    """x: (B, C, H, W) NCHW. w_fc1: (C//ratio, C), w_fc2: (C, C//ratio) — torch
    Conv2d 1x1 (out, in) layouts, no bias. Returns (B, C, 1, 1)."""
    B, C, H, W = x.shape
    C_r = w_fc1.shape[0]
    HW = H * W
    itemsize = x.dtype.itemsize
    x_flat = x.reshape(B, C, HW)

    if hw_tile is None:
        hw_tile = _choose_hw_tile(C, HW, itemsize, vmem_budget_bytes)
    t_hw = int(hw_tile)
    assert t_hw % 128 == 0, "hw_tile must be a multiple of 128"
    num_hw_tiles = pl.cdiv(HW, t_hw)
    needs_mask = (HW % t_hw) != 0

    kernel = _make_channel_attention_kernel(HW, t_hw, needs_mask)

    w_bytes = (w_fc1.size * w_fc1.dtype.itemsize
               + w_fc2.size * w_fc2.dtype.itemsize)
    # Explicit scoped-VMEM limit: raise v5e's 16 MiB default for bigger tiles,
    # stay well inside v7x's 64 MiB physical VMEM.
    vmem_limit = (2 * C * t_hw * itemsize   # double-buffered input tiles
                  + 2 * w_bytes             # resident (double-buffered) weights
                  + 2 * C * 128 * 4         # sum / max accumulators
                  + 2 * C * itemsize        # output block
                  + (4 << 20))              # headroom
    vmem_limit = int(min(48 << 20, max(32 << 20, vmem_limit)))

    cost = pl.CostEstimate(
        flops=2 * B * C * HW + 6 * B * C * C_r,
        transcendentals=B * C,
        bytes_accessed=B * C * HW * itemsize + w_bytes + B * C * itemsize,
    )

    out = pl.pallas_call(
        kernel,
        out_shape=jax.ShapeDtypeStruct((B, C, 1), x.dtype),
        grid_spec=pltpu.PrefetchScalarGridSpec(
            num_scalar_prefetch=0,
            grid=(B, num_hw_tiles),
            in_specs=[
                # Batch dim squeezed; a (C, T_HW) tile of the spatial reduction.
                pl.BlockSpec((None, C, t_hw), lambda b, k: (b, 0, k)),
                # Weights: constant index_map -> fetched once, stay resident.
                pl.BlockSpec((C_r, C), lambda b, k: (0, 0)),
                pl.BlockSpec((C, C_r), lambda b, k: (0, 0)),
            ],
            out_specs=pl.BlockSpec((None, C, 1), lambda b, k: (b, 0, 0)),
            scratch_shapes=[
                pltpu.VMEM((C, 128), jnp.float32),   # lane-wide running sum
                pltpu.VMEM((C, 128), jnp.float32),   # lane-wide running max
            ],
        ),
        compiler_params=pltpu.CompilerParams(
            dimension_semantics=("parallel", "arbitrary"),
            vmem_limit_bytes=vmem_limit),
        cost_estimate=cost,
    )(x_flat, w_fc1, w_fc2)

    return out.reshape(B, C, 1, 1)


def channel_attention_ref(x, w_fc1, w_fc2):
    """Pure-JAX reference matching the PyTorch forward."""
    avg = jnp.mean(x, axis=(2, 3))                       # (B, C)
    mx = jnp.max(x, axis=(2, 3))                         # (B, C)

    def mlp(v):
        h = jnp.maximum(v @ w_fc1.T, 0.0)                # (B, C_r)
        return h @ w_fc2.T                               # (B, C)

    out = jax.nn.sigmoid(mlp(avg) + mlp(mx))
    return out.reshape(*out.shape, 1, 1)


if __name__ == "__main__":
    key = jax.random.PRNGKey(0)
    kx, k1, k2, kx2 = jax.random.split(key, 4)

    B, C, H, W = 2, 64, 16, 16
    ratio = 16
    C_r = C // ratio

    x = jax.random.normal(kx, (B, C, H, W), dtype=jnp.float32)
    # Torch Conv2d 1x1 weights, (out, in) layout, no bias.
    w_fc1 = jax.random.normal(k1, (C_r, C), dtype=jnp.float32) * 0.1
    w_fc2 = jax.random.normal(k2, (C, C_r), dtype=jnp.float32) * 0.1

    # Case 1: 128-divisible spatial extent -> single unmasked tile.
    out = jax.block_until_ready(channel_attention(x, w_fc1, w_fc2))
    ref = channel_attention_ref(x, w_fc1, w_fc2)
    assert out.shape == (B, C, 1, 1)
    assert jnp.allclose(out, ref, atol=1e-5, rtol=1e-5)

    # Case 2: HW=400 with a forced small tile -> 4 tiles, masked tail tile only.
    H2, W2 = 20, 20
    x2 = jax.random.normal(kx2, (B, C, H2, W2), dtype=jnp.float32)
    out2 = jax.block_until_ready(channel_attention(x2, w_fc1, w_fc2, hw_tile=128))
    ref2 = channel_attention_ref(x2, w_fc1, w_fc2)
    assert out2.shape == (B, C, 1, 1)
    assert jnp.allclose(out2, ref2, atol=1e-5, rtol=1e-5)

    # Case 3: HW=400 with the auto-chosen tile (384) -> 2 tiles, masked tail,
    # multi-fold (3x128) lane-wide accumulation path.
    out3 = jax.block_until_ready(channel_attention(x2, w_fc1, w_fc2))
    assert out3.shape == (B, C, 1, 1)
    assert jnp.allclose(out3, ref2, atol=1e-5, rtol=1e-5)

    print("KERNEL_OK")
</pallas_src>

<mosaic_0001>
module attributes {stable_mosaic.version = 11 : i64} {
  func.func @kernel(%arg0: i32, %arg1: i32, %arg2: memref<1x64x256xf32, #tpu.memory_space<vmem>>, %arg3: memref<4x64xf32, #tpu.memory_space<vmem>>, %arg4: memref<64x4xf32, #tpu.memory_space<vmem>>, %arg5: memref<1x64x1xf32, #tpu.memory_space<vmem>>, %arg6: memref<64x128xf32, #tpu.memory_space<vmem>>, %arg7: memref<64x128xf32, #tpu.memory_space<vmem>>) attributes {dimension_semantics = [#tpu.dimension_semantics<parallel>, #tpu.dimension_semantics<arbitrary>], iteration_bounds = array<i64: 2, 1>, scalar_prefetch = 0 : i64, scratch_operands = 2 : i64, tpu.core_type = #tpu.core_type<tc>, window_params = [{transform_indices = @transform_0, window_bounds = array<i64: 1, 64, 256>}, {pipeline_mode = #tpu.pipeline_mode<synchronous>, transform_indices = @transform_1, window_bounds = array<i64: 4, 64>}, {pipeline_mode = #tpu.pipeline_mode<synchronous>, transform_indices = @transform_2, window_bounds = array<i64: 64, 4>}, {transform_indices = @transform_3, window_bounds = array<i64: 1, 64, 1>}]} {
    %c0_i32 = arith.constant 0 : i32
    %0 = arith.cmpi eq, %arg1, %c0_i32 : i32
    %1 = arith.extui %0 : i1 to i32
    %c0_i32_0 = arith.constant 0 : i32
    %2 = arith.cmpi ne, %1, %c0_i32_0 : i32
    scf.if %2 {
      %cst = arith.constant 0.000000e+00 : f32
      %18 = vector.broadcast %cst : f32 to vector<64x128xf32>
      %c0_15 = arith.constant 0 : index
      %c0_16 = arith.constant 0 : index
      %19 = vector.load %arg6[%c0_15, %c0_16] : memref<64x128xf32, #tpu.memory_space<vmem>>, vector<64x128xf32>
      tpu.vector_store %arg6[%c0_15, %c0_16], %18 {strides = array<i32>} : memref<64x128xf32, #tpu.memory_space<vmem>>, vector<64x128xf32>,
      %cst_17 = arith.constant 0xFF800000 : f32
      %20 = vector.broadcast %cst_17 : f32 to vector<64x128xf32>
      %c0_18 = arith.constant 0 : index
      %c0_19 = arith.constant 0 : index
      %21 = vector.load %arg7[%c0_18, %c0_19] : memref<64x128xf32, #tpu.memory_space<vmem>>, vector<64x128xf32>
      tpu.vector_store %arg7[%c0_18, %c0_19], %20 {strides = array<i32>} : memref<64x128xf32, #tpu.memory_space<vmem>>, vector<64x128xf32>,
    } else {
    }
    %c0 = arith.constant 0 : index
    %c0_1 = arith.constant 0 : index
    %c0_2 = arith.constant 0 : index
    %3 = vector.load %arg2[%c0, %c0_1, %c0_2] : memref<1x64x256xf32, #tpu.memory_space<vmem>>, vector<1x64x128xf32>
    %4 = vector.shape_cast %3 : vector<1x64x128xf32> to vector<64x128xf32>
    %c0_3 = arith.constant 0 : index
    %c0_4 = arith.constant 0 : index
    %c128 = arith.constant 128 : index
    %5 = vector.load %arg2[%c0_3, %c0_4, %c128] : memref<1x64x256xf32, #tpu.memory_space<vmem>>, vector<1x64x128xf32>
    %6 = vector.shape_cast %5 : vector<1x64x128xf32> to vector<64x128xf32>
    %7 = arith.addf %4, %6 : vector<64x128xf32>
    %8 = arith.maximumf %4, %6 : vector<64x128xf32>
    %c0_5 = arith.constant 0 : index
    %c0_6 = arith.constant 0 : index
    %9 = vector.load %arg6[%c0_5, %c0_6] : memref<64x128xf32, #tpu.memory_space<vmem>>, vector<64x128xf32>
    %10 = arith.addf %9, %7 : vector<64x128xf32>
    %c0_7 = arith.constant 0 : index
    %c0_8 = arith.constant 0 : index
    %11 = vector.load %arg6[%c0_7, %c0_8] : memref<64x128xf32, #tpu.memory_space<vmem>>, vector<64x128xf32>
    tpu.vector_store %arg6[%c0_7, %c0_8], %10 {strides = array<i32>} : memref<64x128xf32, #tpu.memory_space<vmem>>, vector<64x128xf32>,
    %c0_9 = arith.constant 0 : index
    %c0_10 = arith.constant 0 : index
    %12 = vector.load %arg7[%c0_9, %c0_10] : memref<64x128xf32, #tpu.memory_space<vmem>>, vector<64x128xf32>
    %13 = arith.maximumf %12, %8 : vector<64x128xf32>
    %c0_11 = arith.constant 0 : index
    %c0_12 = arith.constant 0 : index
    %14 = vector.load %arg7[%c0_11, %c0_12] : memref<64x128xf32, #tpu.memory_space<vmem>>, vector<64x128xf32>
    tpu.vector_store %arg7[%c0_11, %c0_12], %13 {strides = array<i32>} : memref<64x128xf32, #tpu.memory_space<vmem>>, vector<64x128xf32>,
    %c0_i32_13 = arith.constant 0 : i32
    %15 = arith.cmpi eq, %arg1, %c0_i32_13 : i32
    %16 = arith.extui %15 : i1 to i32
    %c0_i32_14 = arith.constant 0 : i32
    %17 = arith.cmpi ne, %16, %c0_i32_14 : i32
    scf.if %17 {
      %c0_15 = arith.constant 0 : index
      %c0_16 = arith.constant 0 : index
      %18 = vector.load %arg6[%c0_15, %c0_16] : memref<64x128xf32, #tpu.memory_space<vmem>>, vector<64x128xf32>
      %cst = arith.constant dense<0.000000e+00> : vector<64xf32>
      %19 = vector.multi_reduction <add>, %18, %cst [1] : vector<64x128xf32> to vector<64xf32>
      %20 = vector.shape_cast %19 : vector<64xf32> to vector<64x1xf32>
      %cst_17 = arith.constant 3.906250e-03 : f32
      %21 = vector.broadcast %cst_17 : f32 to vector<64x1xf32>
      %22 = arith.mulf %20, %21 : vector<64x1xf32>
      %c0_18 = arith.constant 0 : index
      %c0_19 = arith.constant 0 : index
      %23 = vector.load %arg7[%c0_18, %c0_19] : memref<64x128xf32, #tpu.memory_space<vmem>>, vector<64x128xf32>
      %cst_20 = arith.constant dense<0xFF800000> : vector<64xf32>
      %24 = vector.multi_reduction <maximumf>, %23, %cst_20 [1] : vector<64x128xf32> to vector<64xf32>
      %25 = vector.shape_cast %24 : vector<64xf32> to vector<64x1xf32>
      %c0_21 = arith.constant 0 : index
      %c0_22 = arith.constant 0 : index
      %26 = vector.load %arg3[%c0_21, %c0_22] : memref<4x64xf32, #tpu.memory_space<vmem>>, vector<4x64xf32>
      %c0_23 = arith.constant 0 : index
      %c0_24 = arith.constant 0 : index
      %27 = vector.load %arg4[%c0_23, %c0_24] : memref<64x4xf32, #tpu.memory_space<vmem>>, vector<64x4xf32>
      %cst_25 = arith.constant dense<0.000000e+00> : vector<4x1xf32>
      %28 = tpu.matmul %26, %22, %cst_25 {dimension_numbers = #tpu.dot_dimension_numbers<[1], [0], [0], [1], [0, 0, 1, 1], [], []>} : vector<4x64xf32>, vector<64x1xf32>, vector<4x1xf32> -> vector<4x1xf32>
      %cst_26 = arith.constant 0.000000e+00 : f32
      %29 = vector.broadcast %cst_26 : f32 to vector<4x1xf32>
      %30 = arith.maximumf %28, %29 : vector<4x1xf32>
      %cst_27 = arith.constant dense<0.000000e+00> : vector<4x1xf32>
      %31 = tpu.matmul %26, %25, %cst_27 {dimension_numbers = #tpu.dot_dimension_numbers<[1], [0], [0], [1], [0, 0, 1, 1], [], []>} : vector<4x64xf32>, vector<64x1xf32>, vector<4x1xf32> -> vector<4x1xf32>
      %cst_28 = arith.constant 0.000000e+00 : f32
      %32 = vector.broadcast %cst_28 : f32 to vector<4x1xf32>
      %33 = arith.maximumf %31, %32 : vector<4x1xf32>
      %34 = arith.addf %30, %33 : vector<4x1xf32>
      %cst_29 = arith.constant dense<0.000000e+00> : vector<64x1xf32>
      %35 = tpu.matmul %27, %34, %cst_29 {dimension_numbers = #tpu.dot_dimension_numbers<[1], [0], [0], [1], [0, 0, 1, 1], [], []>} : vector<64x4xf32>, vector<4x1xf32>, vector<64x1xf32> -> vector<64x1xf32>
      %36 = arith.negf %35 : vector<64x1xf32>
      %37 = math.exp %36 : vector<64x1xf32>
      %cst_30 = arith.constant 1.000000e+00 : f32
      %38 = vector.broadcast %cst_30 : f32 to vector<64x1xf32>
      %39 = arith.addf %38, %37 : vector<64x1xf32>
      %40 = arith.divf %38, %39 : vector<64x1xf32>
      %c0_31 = arith.constant 0 : index
      %c0_32 = arith.constant 0 : index
      %c0_33 = arith.constant 0 : index
      %41 = vector.load %arg5[%c0_31, %c0_32, %c0_33] : memref<1x64x1xf32, #tpu.memory_space<vmem>>, vector<1x64x1xf32>
      %42 = vector.shape_cast %41 : vector<1x64x1xf32> to vector<64x1xf32>
      %43 = vector.shape_cast %40 : vector<64x1xf32> to vector<1x64x1xf32>
      tpu.vector_store %arg5[%c0_31, %c0_32, %c0_33], %43 {strides = array<i32>} : memref<1x64x1xf32, #tpu.memory_space<vmem>>, vector<1x64x1xf32>,
    } else {
    }
    return
  }
  func.func @transform_0(%arg0: i32, %arg1: i32) -> (i32, i32, i32) {
    %c0_i32 = arith.constant 0 : i32
    %c0_i32_0 = arith.constant 0 : i32
    return %arg0, %c0_i32, %arg1 : i32, i32, i32
  }
  func.func @transform_1(%arg0: i32, %arg1: i32) -> (i32, i32) {
    %c0_i32 = arith.constant 0 : i32
    %c0_i32_0 = arith.constant 0 : i32
    %c0_i32_1 = arith.constant 0 : i32
    return %c0_i32, %c0_i32_0 : i32, i32
  }
  func.func @transform_2(%arg0: i32, %arg1: i32) -> (i32, i32) {
    %c0_i32 = arith.constant 0 : i32
    %c0_i32_0 = arith.constant 0 : i32
    %c0_i32_1 = arith.constant 0 : i32
    return %c0_i32, %c0_i32_0 : i32, i32
  }
  func.func @transform_3(%arg0: i32, %arg1: i32) -> (i32, i32, i32) {
    %c0_i32 = arith.constant 0 : i32
    %c0_i32_0 = arith.constant 0 : i32
    %c0_i32_1 = arith.constant 0 : i32
    return %arg0, %c0_i32, %c0_i32_0 : i32, i32, i32
  }
}

</mosaic_0001>

<llo_original>
// kernel: tpu_custom_call.1
$region0: #{tpu_custom_call.1}
  #allocation0 [shape = 'u32[]', space=smem, size = 0x4, offset = 0x4, fixed_abs, tag = 'smem constant byte address 0x4 - core index']
  #allocation1 [shape = 'u32[144,128]{1,0:T(1,128)}', space=vmem, size = 0x12000, scoped, tag = 'internal scratch']
  #allocation2 [shape = 'f32[64,128]{1,0:T(8,128)}', space=vmem, size = 0x8000, scoped, tag = 'scratch operand']
  #allocation3 [shape = 'f32[64,128]{1,0:T(8,128)}', space=vmem, size = 0x8000, scoped, tag = 'scratch operand']
  %s0 = inlined_call_operand.hbm [shape: f32[2,64,256], index: 0, kind: input, shape index: {}]
  %s1 = inlined_call_operand.vmem [shape: f32[4,64], index: 1, kind: input, shape index: {}]
  %s2 = inlined_call_operand.vmem [shape: f32[64,4], index: 2, kind: input, shape index: {}]
  %s3 = inlined_call_operand.vmem [shape: f32[2,64,1], index: 3, kind: output, shape index: {}]
  %s4 = sld [smem:[#allocation0]]
  $region57: #{tpu_custom_call.1} parent=0
    _
  %s6 = ssub.s32 1, %s4
  %s7 = scalar_select 0, %s6, %s4
  $region1: #{tpu_custom_call.1} parent=0
    #allocation4 [shape = 'u8[131072]{0}', space=vmem, size = 0x20000, scoped, tag = 'input window, operand 0']
    #allocation5 [shape = 's32[2]{0}', space=sflag, size = 0x8, scoped, tag = 'scoped memory for tpu_custom_call.1']
    %8 = vsyncpa [#allocation5], 0
    %s9 = scalar_lea.sflag [#allocation5], 1
    %10 = vsyncpa %s9, 0
    loop: start=0, step=1, limit=4
    $region2: #{tpu_custom_call.1} parent=1 // loop_pre_header
      _
    $region3: #{tpu_custom_call.1} parent=1 // loop_header
      %s12 = sphi 0, %s16
      %p13 = scmp.ge.s32.totalorder %s12, 4
      %s19 = sphi 0, %s31
      %s20 = sphi 0, %s27
      %s21 = sphi 0, %s19
      %s22 = sphi 0, %s20
      %s23 = sphi 0, %s21
      %s24 = sphi 0, %s22
      %s36 = sphi 0, %s38
      %s39 = sphi 0, %s36
      %s40 = sphi 0, %s39
      %s56 = sphi 0, %s40
      %s60 = sphi 0, %s60
      %s62 = sphi 0, %s60
      %s63 = sphi 0, %s62
      %s77 = sphi 0, %s63
      %s81 = sphi 0, %s81
      %s83 = sphi 0, %s81
      %s84 = sphi 0, %s83
      %s98 = sphi 0, %s84
      %s104 = sphi 0, %s106
      %s107 = sphi 0, %s104
      %s108 = sphi 0, %s107
      %s124 = sphi 0, %s108
    $region4: #{tpu_custom_call.1} parent=1 // loop_header_branch
      %15 = sbr.rel (%p13) target = $region8
    $region5: #{tpu_custom_call.1} parent=1 // loop_body
      %s17 = ssub.s32 %s12, 1
      %s18 = ssub.s32 %s12, 2
      %s25 = sadd.s32 1, %s20
      %p26 = scmp.ge.s32.totalorder %s25, 1
      %s27 = scalar_select %p26, 0, %s25
      %s28 = sadd.s32 1, %s19
      %s29 = scalar_select %p26, %s28, %s19
      %p30 = scmp.ge.s32.totalorder %s29, 2
      %s31 = scalar_select %p30, 0, %s29
      %s32 = ssub.s32 %s19, %s31
      %s33 = ssub.s32 %s20, %s27
      %s34 = sor.u32 %s32, %s33
      %p35 = scmp.eq.s32.totalorder %s34, 0
      %s37 = sadd.s32 %s36, 1
      %s38 = scalar_select %p35, %s36, %s37
      %p41 = pneg %p35
      %p42 = scmp.eq.s32.totalorder %s12, 1
      %p43 = por %p41, %p42
      %p44 = scmp.ne.s32.totalorder %s36, %s39
      %p45 = scmp.eq.s32.totalorder %s12, 0
      %p46 = por %p44, %p45
      %p47 = scmp.ne.s32.totalorder %s36, %s39
      %p48 = scmp.eq.s32.totalorder %s17, 1
      %p49 = por %p47, %p48
      %p50 = scmp.ne.s32.totalorder %s39, %s40
      %p51 = scmp.eq.s32.totalorder %s17, 0
      %p52 = por %p50, %p51
      %p53 = scmp.ne.s32.totalorder %s39, %s40
      %p54 = scmp.eq.s32.totalorder %s18, 1
      %p55 = por %p53, %p54
      %p57 = scmp.ne.s32.totalorder %s40, %s56
      %p58 = scmp.eq.s32.totalorder %s18, 0
      %p59 = por %p57, %p58
      %s61 = sadd.s32 %s60, 1
      %p64 = scmp.eq.s32.totalorder %s12, 1
      %p65 = scmp.ne.s32.totalorder %s60, %s62
      %p66 = scmp.eq.s32.totalorder %s12, 0
      %p67 = por %p65, %p66
      %p68 = scmp.ne.s32.totalorder %s60, %s62
      %p69 = scmp.eq.s32.totalorder %s17, 1
      %p70 = por %p68, %p69
      %p71 = scmp.ne.s32.totalorder %s62, %s63
      %p72 = scmp.eq.s32.totalorder %s17, 0
      %p73 = por %p71, %p72
      %p74 = scmp.ne.s32.totalorder %s62, %s63
      %p75 = scmp.eq.s32.totalorder %s18, 1
      %p76 = por %p74, %p75
      %p78 = scmp.ne.s32.totalorder %s63, %s77
      %p79 = scmp.eq.s32.totalorder %s18, 0
      %p80 = por %p78, %p79
      %s82 = sadd.s32 %s81, 1
      %p85 = scmp.eq.s32.totalorder %s12, 1
      %p86 = scmp.ne.s32.totalorder %s81, %s83
      %p87 = scmp.eq.s32.totalorder %s12, 0
      %p88 = por %p86, %p87
      %p89 = scmp.ne.s32.totalorder %s81, %s83
      %p90 = scmp.eq.s32.totalorder %s17, 1
      %p91 = por %p89, %p90
      %p92 = scmp.ne.s32.totalorder %s83, %s84
      %p93 = scmp.eq.s32.totalorder %s17, 0
      %p94 = por %p92, %p93
      %p95 = scmp.ne.s32.totalorder %s83, %s84
      %p96 = scmp.eq.s32.totalorder %s18, 1
      %p97 = por %p95, %p96
      %p99 = scmp.ne.s32.totalorder %s84, %s98
      %p100 = scmp.eq.s32.totalorder %s18, 0
      %p101 = por %p99, %p100
      %s102 = ssub.s32 %s19, %s31
      %p103 = scmp.eq.s32.totalorder %s102, 0
      %s105 = sadd.s32 %s104, 1
      %s106 = scalar_select %p103, %s104, %s105
      %p109 = pneg %p103
      %p110 = scmp.eq.s32.totalorder %s12, 1
      %p111 = por %p109, %p110
      %p112 = scmp.ne.s32.totalorder %s104, %s107
      %p113 = scmp.eq.s32.totalorder %s12, 0
      %p114 = por %p112, %p113
      %p115 = scmp.ne.s32.totalorder %s104, %s107
      %p116 = scmp.eq.s32.totalorder %s17, 1
      %p117 = por %p115, %p116
      %p118 = scmp.ne.s32.totalorder %s107, %s108
      %p119 = scmp.eq.s32.totalorder %s17, 0
      %p120 = por %p118, %p119
      %p121 = scmp.ne.s32.totalorder %s107, %s108
      %p122 = scmp.eq.s32.totalorder %s18, 1
      %p123 = por %p121, %p122
      %p125 = scmp.ne.s32.totalorder %s108, %s124
      %p126 = scmp.eq.s32.totalorder %s18, 0
      %p127 = por %p125, %p126
      %p128 = scmp.le.s32.totalorder 1, %s12
      %p129 = scmp.lt.s32.totalorder %s12, 3
      %p130 = pnand %p128, %p129
      %p131 = pneg %p130
      // Predicated region
      $region9: #{tpu_custom_call.1} parent=5 // pred_check
        _
      $region10: #{tpu_custom_call.1} parent=5 // pred_check_branch
        %133 = sbr.rel (%p130) target = $region12
      $region11: #{tpu_custom_call.1} parent=5 // pred_region
        %s134 = ssub.s32 %s12, 1
        // Predicated region
        $region13: #{tpu_custom_call.1} parent=11 // pred_check
          %p135 = pneg %p73
        $region14: #{tpu_custom_call.1} parent=11 // pred_check_branch
          %137 = sbr.rel (%p135) target = $region16
        $region15: #{tpu_custom_call.1} parent=11 // pred_region
          _
        $region16: #{tpu_custom_call.1} parent=11 // pred_fallthru
          _
        // Predicated region
        $region17: #{tpu_custom_call.1} parent=11 // pred_check
          %p138 = pneg %p94
        $region18: #{tpu_custom_call.1} parent=11 // pred_check_branch
          %140 = sbr.rel (%p138) target = $region20
        $region19: #{tpu_custom_call.1} parent=11 // pred_region
          _
        $region20: #{tpu_custom_call.1} parent=11 // pred_fallthru
          _
      $region12: #{tpu_custom_call.1} parent=5 // pred_fallthru
        _
      %p141 = scmp.lt.s32.totalorder %s12, 2
      // Predicated region
      $region21: #{tpu_custom_call.1} parent=5 // pred_check
        %p142 = pneg %p141
      $region22: #{tpu_custom_call.1} parent=5 // pred_check_branch
        %144 = sbr.rel (%p142) target = $region24
      $region23: #{tpu_custom_call.1} parent=5 // pred_region
        // Predicated region
        $region25: #{tpu_custom_call.1} parent=23 // pred_check
          %p145 = pneg %p46
        $region26: #{tpu_custom_call.1} parent=23 // pred_check_branch
          %147 = sbr.rel (%p145) target = $region28
        $region27: #{tpu_custom_call.1} parent=23 // pred_region
          %s148 = sand.u32 %s36, 1
          %s149 = scalar_lea.sflag [#allocation5], %s148
          %s150 = sand.u32 %s36, 1
          %s151 = smul.addr %s150, 128
          %s152 = scalar_lea.vmem [#allocation4], %s151
          %s153 = smul.u32 2, %s20
          %s155 = ssub.s32 2048, 2048
          %156 = vsyncadd %s149, %s155
          %s157 = smul.addr %s19, 16
          %s158 = sadd.s32 %s153, %s157
          %s159 = smul.addr %s158, 128
          %s160 = scalar_lea.hbm %s0, %s159
          %s161 = sshll.u32 %s152, 4
          %s162 = int_to_ptr.vmem [resolvable:$true] %s161
          %167 = dma.hbm_to_vmem [thread:$0]  %s160, 2048, %s162, %s149, 256, 256, 16
        $region28: #{tpu_custom_call.1} parent=23 // pred_fallthru
          _
      $region24: #{tpu_custom_call.1} parent=5 // pred_fallthru
        _
      %p168 = scmp.le.s32.totalorder 1, %s12
      %p169 = scmp.lt.s32.totalorder %s12, 3
      %p170 = pnand %p168, %p169
      %p171 = pneg %p170
      // Predicated region
      $region29: #{tpu_custom_call.1} parent=5 // pred_check
        _
      $region30: #{tpu_custom_call.1} parent=5 // pred_check_branch
        %173 = sbr.rel (%p170) target = $region32
      $region31: #{tpu_custom_call.1} parent=5 // pred_region
        %s174 = ssub.s32 %s12, 1
        %s175 = sand.u32 %s39, 1
        %s176 = scalar_lea.sflag [#allocation5], %s175
        %s177 = sand.u32 %s39, 1
        %s178 = smul.addr %s177, 128
        %s179 = scalar_lea.vmem [#allocation4], %s178
        // Predicated region
        $region33: #{tpu_custom_call.1} parent=31 // pred_check
          %p180 = pneg %p52
        $region34: #{tpu_custom_call.1} parent=31 // pred_check_branch
          %182 = sbr.rel (%p180) target = $region36
        $region35: #{tpu_custom_call.1} parent=31 // pred_region
          %183 = dma.done %s176, 2048
        $region36: #{tpu_custom_call.1} parent=31 // pred_fallthru
          _
        %s184 = sand.u32 %s39, 1
        %s185 = scalar_lea.sflag [#allocation5], %s184
        %s186 = sand.u32 %s39, 1
        %s187 = smul.addr %s186, 128
        %s188 = scalar_lea.vmem [#allocation4], %s187
        %p189 = pneg %p52
        %p190 = pneg %p49
        %p191 = pneg %p73
        %p192 = pneg %p70
        %p193 = pneg %p94
        %p194 = pneg %p91
        %p195 = pneg %p120
        %p196 = pneg %p117
        %p197 = scmp.lt.s32.totalorder %s21, 1
        %s198 = scalar_select %p197, %s21, 1
        %s199 = smul.addr %s198, 8
        %s200 = smul.addr %s199, 8
        %s201 = scalar_lea.vmem %s3, %s200
        %s202 = smul.u32 2, %s22
        %p203 = scmp.lt.s32.totalorder %s21, 1
        %s204 = scalar_select %p203, %s21, 1
        %s205 = smul.addr %s204, 8
        %s206 = smul.addr %s205, 8
        %s207 = scalar_lea.vmem %s3, %s206
        %p208 = scmp.eq.s32.totalorder %s22, 0
        // Predicated region
        $region37: #{tpu_custom_call.1} parent=31 // pred_check
          %p209 = pneg %p208
        $region38: #{tpu_custom_call.1} parent=31 // pred_check_branch
          %211 = sbr.rel (%p209) target = $region40
        $region39: #{tpu_custom_call.1} parent=31 // pred_region
          %212 = vst [vmem:[#allocation2] sm:$0xff] 0.0
          %213 = vst [vmem:[#allocation2 + $0x8] sm:$0xff] 0.0
          %214 = vst [vmem:[#allocation2 + $0x10] sm:$0xff] 0.0
          %215 = vst [vmem:[#allocation2 + $0x18] sm:$0xff] 0.0
          %216 = vst [vmem:[#allocation2 + $0x20] sm:$0xff] 0.0
          %217 = vst [vmem:[#allocation2 + $0x28] sm:$0xff] 0.0
          %218 = vst [vmem:[#allocation2 + $0x30] sm:$0xff] 0.0
          %219 = vst [vmem:[#allocation2 + $0x38] sm:$0xff] 0.0
          %220 = vst [vmem:[#allocation3] sm:$0xff] -inf
          %221 = vst [vmem:[#allocation3 + $0x8] sm:$0xff] -inf
          %222 = vst [vmem:[#allocation3 + $0x10] sm:$0xff] -inf
          %223 = vst [vmem:[#allocation3 + $0x18] sm:$0xff] -inf
          %224 = vst [vmem:[#allocation3 + $0x20] sm:$0xff] -inf
          %225 = vst [vmem:[#allocation3 + $0x28] sm:$0xff] -inf
          %226 = vst [vmem:[#allocation3 + $0x30] sm:$0xff] -inf
          %227 = vst [vmem:[#allocation3 + $0x38] sm:$0xff] -inf
        $region40: #{tpu_custom_call.1} parent=31 // pred_fallthru
          _
        %v228 = vld [vmem:[%s179] sm:$0xff]
        %v229 = vld [vmem:[%s179 + $0x10] sm:$0xff]
        %v230 = vld [vmem:[%s179 + $0x20] sm:$0xff]
        %v231 = vld [vmem:[%s179 + $0x30] sm:$0xff]
        %v232 = vld [vmem:[%s179 + $0x40] sm:$0xff]
        %v233 = vld [vmem:[%s179 + $0x50] sm:$0xff]
        %v234 = vld [vmem:[%s179 + $0x60] sm:$0xff]
        %v235 = vld [vmem:[%s179 + $0x70] sm:$0xff]
        %v236 = vld [vmem:[%s179 + $0x8] sm:$0xff]
        %v237 = vld [vmem:[%s179 + $0x18] sm:$0xff]
        %v238 = vld [vmem:[%s179 + $0x28] sm:$0xff]
        %v239 = vld [vmem:[%s179 + $0x38] sm:$0xff]
        %v240 = vld [vmem:[%s179 + $0x48] sm:$0xff]
        %v241 = vld [vmem:[%s179 + $0x58] sm:$0xff]
        %v242 = vld [vmem:[%s179 + $0x68] sm:$0xff]
        %v243 = vld [vmem:[%s179 + $0x78] sm:$0xff]
        %v244 = vadd.f32 %v228, %v236
        %v245 = vadd.f32 %v229, %v237
        %v246 = vadd.f32 %v230, %v238
        %v247 = vadd.f32 %v231, %v239
        %v248 = vadd.f32 %v232, %v240
        %v249 = vadd.f32 %v233, %v241
        %v250 = vadd.f32 %v234, %v242
        %v251 = vadd.f32 %v235, %v243
        %v252 = vmax.f32 %v228, %v236
        %v253 = vmax.f32 %v229, %v237
        %v254 = vmax.f32 %v230, %v238
        %v255 = vmax.f32 %v231, %v239
        %v256 = vmax.f32 %v232, %v240
        %v257 = vmax.f32 %v233, %v241
        %v258 = vmax.f32 %v234, %v242
        %v259 = vmax.f32 %v235, %v243
        %v260 = vld [vmem:[#allocation2] sm:$0xff]
        %v261 = vld [vmem:[#allocation2 + $0x8] sm:$0xff]
        %v262 = vld [vmem:[#allocation2 + $0x10] sm:$0xff]
        %v263 = vld [vmem:[#allocation2 + $0x18] sm:$0xff]
        %v264 = vld [vmem:[#allocation2 + $0x20] sm:$0xff]
        %v265 = vld [vmem:[#allocation2 + $0x28] sm:$0xff]
        %v266 = vld [vmem:[#allocation2 + $0x30] sm:$0xff]
        %v267 = vld [vmem:[#allocation2 + $0x38] sm:$0xff]
        %v268 = vadd.f32 %v260, %v244
        %v269 = vadd.f32 %v261, %v245
        %v270 = vadd.f32 %v262, %v246
        %v271 = vadd.f32 %v263, %v247
        %v272 = vadd.f32 %v264, %v248
        %v273 = vadd.f32 %v265, %v249
        %v274 = vadd.f32 %v266, %v250
        %v275 = vadd.f32 %v267, %v251
        %276 = vst [vmem:[#allocation2] sm:$0xff] %v268
        %277 = vst [vmem:[#allocation2 + $0x8] sm:$0xff] %v269
        %278 = vst [vmem:[#allocation2 + $0x10] sm:$0xff] %v270
        %279 = vst [vmem:[#allocation2 + $0x18] sm:$0xff] %v271
        %280 = vst [vmem:[#allocation2 + $0x20] sm:$0xff] %v272
        %281 = vst [vmem:[#allocation2 + $0x28] sm:$0xff] %v273
        %282 = vst [vmem:[#allocation2 + $0x30] sm:$0xff] %v274
        %283 = vst [vmem:[#allocation2 + $0x38] sm:$0xff] %v275
        %v284 = vld [vmem:[#allocation3] sm:$0xff]
        %v285 = vld [vmem:[#allocation3 + $0x8] sm:$0xff]
        %v286 = vld [vmem:[#allocation3 + $0x10] sm:$0xff]
        %v287 = vld [vmem:[#allocation3 + $0x18] sm:$0xff]
        %v288 = vld [vmem:[#allocation3 + $0x20] sm:$0xff]
        %v289 = vld [vmem:[#allocation3 + $0x28] sm:$0xff]
        %v290 = vld [vmem:[#allocation3 + $0x30] sm:$0xff]
        %v291 = vld [vmem:[#allocation3 + $0x38] sm:$0xff]
        %v292 = vmax.f32 %v284, %v252
        %v293 = vmax.f32 %v285, %v253
        %v294 = vmax.f32 %v286, %v254
        %v295 = vmax.f32 %v287, %v255
        %v296 = vmax.f32 %v288, %v256
        %v297 = vmax.f32 %v289, %v257
        %v298 = vmax.f32 %v290, %v258
        %v299 = vmax.f32 %v291, %v259
        %300 = vst [vmem:[#allocation3] sm:$0xff] %v292
        %301 = vst [vmem:[#allocation3 + $0x8] sm:$0xff] %v293
        %302 = vst [vmem:[#allocation3 + $0x10] sm:$0xff] %v294
        %303 = vst [vmem:[#allocation3 + $0x18] sm:$0xff] %v295
        %304 = vst [vmem:[#allocation3 + $0x20] sm:$0xff] %v296
        %305 = vst [vmem:[#allocation3 + $0x28] sm:$0xff] %v297
        %306 = vst [vmem:[#allocation3 + $0x30] sm:$0xff] %v298
        %307 = vst [vmem:[#allocation3 + $0x38] sm:$0xff] %v299
        // Predicated region
        $region41: #{tpu_custom_call.1} parent=31 // pred_check
          %p308 = pneg %p208
        $region42: #{tpu_custom_call.1} parent=31 // pred_check_branch
          %310 = sbr.rel (%p308) target = $region44
        $region43: #{tpu_custom_call.1} parent=31 // pred_region
          %v311 = vld [vmem:[#allocation2] sm:$0xff]
          %v312 = vld [vmem:[#allocation2 + $0x8] sm:$0xff]
          %v313 = vld [vmem:[#allocation2 + $0x10] sm:$0xff]
          %v314 = vld [vmem:[#allocation2 + $0x18] sm:$0xff]
          %v315 = vld [vmem:[#allocation2 + $0x20] sm:$0xff]
          %v316 = vld [vmem:[#allocation2 + $0x28] sm:$0xff]
          %v317 = vld [vmem:[#allocation2 + $0x30] sm:$0xff]
          %v318 = vld [vmem:[#allocation2 + $0x38] sm:$0xff]
          %319 = vadd.xlane.f32.xlu0 %v311
          %v320 = vpop.xlane.xlu0 %319
          %321 = vadd.xlane.f32.xlu0 %v312
          %v322 = vpop.xlane.xlu0 %321
          %323 = vadd.xlane.f32.xlu0 %v313
          %v324 = vpop.xlane.xlu0 %323
          %325 = vadd.xlane.f32.xlu0 %v314
          %v326 = vpop.xlane.xlu0 %325
          %327 = vadd.xlane.f32.xlu0 %v315
          %v328 = vpop.xlane.xlu0 %327
          %329 = vadd.xlane.f32.xlu0 %v316
          %v330 = vpop.xlane.xlu0 %329
          %331 = vadd.xlane.f32.xlu0 %v317
          %v332 = vpop.xlane.xlu0 %331
          %333 = vadd.xlane.f32.xlu0 %v318
          %v334 = vpop.xlane.xlu0 %333
          %v335 = vmul.f32 %v320, 0.00390625
          %v336 = vmul.f32 %v322, 0.00390625
          %v337 = vmul.f32 %v324, 0.00390625
          %v338 = vmul.f32 %v326, 0.00390625
          %v339 = vmul.f32 %v328, 0.00390625
          %v340 = vmul.f32 %v330, 0.00390625
          %v341 = vmul.f32 %v332, 0.00390625
          %v342 = vmul.f32 %v334, 0.00390625
          %v343 = vld [vmem:[#allocation3] sm:$0xff]
          %v344 = vld [vmem:[#allocation3 + $0x8] sm:$0xff]
          %v345 = vld [vmem:[#allocation3 + $0x10] sm:$0xff]
          %v346 = vld [vmem:[#allocation3 + $0x18] sm:$0xff]
          %v347 = vld [vmem:[#allocation3 + $0x20] sm:$0xff]
          %v348 = vld [vmem:[#allocation3 + $0x28] sm:$0xff]
          %v349 = vld [vmem:[#allocation3 + $0x30] sm:$0xff]
          %v350 = vld [vmem:[#allocation3 + $0x38] sm:$0xff]
          %351 = vmax.xlane.f32.xlu0 %v343
          %v352 = vpop.xlane.xlu0 %351
          %353 = vmax.xlane.f32.xlu0 %v344
          %v354 = vpop.xlane.xlu0 %353
          %355 = vmax.xlane.f32.xlu0 %v345
          %v356 = vpop.xlane.xlu0 %355
          %357 = vmax.xlane.f32.xlu0 %v346
          %v358 = vpop.xlane.xlu0 %357
          %359 = vmax.xlane.f32.xlu0 %v347
          %v360 = vpop.xlane.xlu0 %359
          %361 = vmax.xlane.f32.xlu0 %v348
          %v362 = vpop.xlane.xlu0 %361
          %363 = vmax.xlane.f32.xlu0 %v349
          %v364 = vpop.xlane.xlu0 %363
          %365 = vmax.xlane.f32.xlu0 %v350
          %v366 = vpop.xlane.xlu0 %365
          %v367 = vld [vmem:[%s1] sm:$0xf]
          %v368 = vld [vmem:[%s2] sm:$0xff]
          %v369 = vld [vmem:[%s2 + $0x8] sm:$0xff]
          %v370 = vld [vmem:[%s2 + $0x10] sm:$0xff]
          %v371 = vld [vmem:[%s2 + $0x18] sm:$0xff]
          %v372 = vld [vmem:[%s2 + $0x20] sm:$0xff]
          %v373 = vld [vmem:[%s2 + $0x28] sm:$0xff]
          %v374 = vld [vmem:[%s2 + $0x30] sm:$0xff]
          %v375 = vld [vmem:[%s2 + $0x38] sm:$0xff]
          %vm376 = vcmask 523264
          %v378 = vsel %vm376, %v367, 0
          %380 = vmatprep.subr.mxu0 0.0
          %381 = vmatpush1.msra.mxu0 %v335
          %382 = vmatprep.subr.mxu0 0.0
          %383 = vmatpush1.msra.mxu0 %v336
          %384 = vmatprep.subr.mxu0 0.0
          %385 = vmatpush1.msra.mxu0 %v337
          %386 = vmatprep.subr.mxu0 0.0
          %387 = vmatpush1.msra.mxu0 %v338
          %388 = vmatprep.subr.mxu0 0.0
          %389 = vmatpush1.msra.mxu0 %v339
          %390 = vmatprep.subr.mxu0 0.0
          %391 = vmatpush1.msra.mxu0 %v340
          %392 = vmatprep.subr.mxu0 0.0
          %393 = vmatpush1.msra.mxu0 %v341
          %394 = vmatprep.subr.mxu0 0.0
          %395 = vmatpush1.msra.mxu0 %v342
          %396 = vmatprep.subr.mxu0 0.0
          %397 = vmatpush1.msra.mxu0 0.0
          %398 = vmatprep.subr.mxu0 0.0
          %399 = vmatpush1.msra.mxu0 0.0
          %400 = vmatprep.subr.mxu0 0.0
          %401 = vmatpush1.msra.mxu0 0.0
          %402 = vmatprep.subr.mxu0 0.0
          %403 = vmatpush1.msra.mxu0 0.0
          %404 = vmatprep.subr.mxu0 0.0
          %405 = vmatpush1.msra.mxu0 0.0
          %406 = vmatprep.subr.mxu0 0.0
          %407 = vmatpush1.msra.mxu0 0.0
          %408 = vmatprep.subr.mxu0 0.0
          %409 = vmatpush1.msra.mxu0 0.0
          %410 = vmatprep.subr.mxu0 0.0
          %411 = vmatpush1.msra.mxu0 0.0
          %412 = vmatprep.subr.mxu0 0.0
          %413 = vmatpush1.msra.mxu0 0.0
          %414 = vmatprep.subr.mxu0 0.0
          %415 = vmatpush1.msra.mxu0 0.0
          %416 = vmatprep.subr.mxu0 0.0
          %417 = vmatpush1.msra.mxu0 0.0
          %418 = vmatprep.subr.mxu0 0.0
          %419 = vmatpush1.msra.mxu0 0.0
          %420 = vmatprep.subr.mxu0 0.0
          %421 = vmatpush1.msra.mxu0 0.0
          %422 = vmatprep.subr.mxu0 0.0
          %423 = vmatpush1.msra.mxu0 0.0
          %424 = vmatprep.subr.mxu0 0.0
          %425 = vmatpush1.msra.mxu0 0.0
          %426 = vmatprep.subr.mxu0 0.0
          %427 = vmatpush1.msra.mxu0 0.0
          %428 = vmatprep.subr.mxu0 0.0
          %429 = vmatpush1.msra.mxu0 0.0
          %430 = vmatprep.subr.mxu0 0.0
          %431 = vmatpush1.msra.mxu0 0.0
          %432 = vmatprep.subr.mxu0 0.0
          %433 = vmatpush1.msra.mxu0 0.0
          %434 = vmatprep.subr.mxu0 0.0
          %435 = vmatpush1.msra.mxu0 0.0
          %436 = vmatprep.subr.mxu0 0.0
          %437 = vmatpush1.msra.mxu0 0.0
          %438 = vmatprep.subr.mxu0 0.0
          %439 = vmatpush1.msra.mxu0 0.0
          %440 = vmatprep.subr.mxu0 0.0
          %441 = vmatpush1.msra.mxu0 0.0
          %442 = vmatprep.subr.mxu0 0.0
          %443 = vmatpush1.msra.mxu0 0.0
          %444 = vmatprep.mubr.f32.mxu0 0.0
          %445 = vmatmul.mubr.f32.gmra.mrb[0].mxu0 %v378
          %v446 = vpop.f32.mrb[0].mxu0
          %v447 = vadd.f32 0.0, %v446
          %v448 = vpop.f32.mrb[0].mxu0
          %449 = vdwg.mxu0
          %v450 = vmax.f32 %v447, 0.0
          %451 = vmatprep.subr.mxu0 0.0
          %452 = vmatpush1.msra.mxu0 %v352
          %453 = vmatprep.subr.mxu0 0.0
          %454 = vmatpush1.msra.mxu0 %v354
          %455 = vmatprep.subr.mxu0 0.0
          %456 = vmatpush1.msra.mxu0 %v356
          %457 = vmatprep.subr.mxu0 0.0
          %458 = vmatpush1.msra.mxu0 %v358
          %459 = vmatprep.subr.mxu0 0.0
          %460 = vmatpush1.msra.mxu0 %v360
          %461 = vmatprep.subr.mxu0 0.0
          %462 = vmatpush1.msra.mxu0 %v362
          %463 = vmatprep.subr.mxu0 0.0
          %464 = vmatpush1.msra.mxu0 %v364
          %465 = vmatprep.subr.mxu0 0.0
          %466 = vmatpush1.msra.mxu0 %v366
          %467 = vmatprep.subr.mxu0 0.0
          %468 = vmatpush1.msra.mxu0 0.0
          %469 = vmatprep.subr.mxu0 0.0
          %470 = vmatpush1.msra.mxu0 0.0
          %471 = vmatprep.subr.mxu0 0.0
          %472 = vmatpush1.msra.mxu0 0.0
          %473 = vmatprep.subr.mxu0 0.0
          %474 = vmatpush1.msra.mxu0 0.0
          %475 = vmatprep.subr.mxu0 0.0
          %476 = vmatpush1.msra.mxu0 0.0
          %477 = vmatprep.subr.mxu0 0.0
          %478 = vmatpush1.msra.mxu0 0.0
          %479 = vmatprep.subr.mxu0 0.0
          %480 = vmatpush1.msra.mxu0 0.0
          %481 = vmatprep.subr.mxu0 0.0
          %482 = vmatpush1.msra.mxu0 0.0
          %483 = vmatprep.subr.mxu0 0.0
          %484 = vmatpush1.msra.mxu0 0.0
          %485 = vmatprep.subr.mxu0 0.0
          %486 = vmatpush1.msra.mxu0 0.0
          %487 = vmatprep.subr.mxu0 0.0
          %488 = vmatpush1.msra.mxu0 0.0
          %489 = vmatprep.subr.mxu0 0.0
          %490 = vmatpush1.msra.mxu0 0.0
          %491 = vmatprep.subr.mxu0 0.0
          %492 = vmatpush1.msra.mxu0 0.0
          %493 = vmatprep.subr.mxu0 0.0
          %494 = vmatpush1.msra.mxu0 0.0
          %495 = vmatprep.subr.mxu0 0.0
          %496 = vmatpush1.msra.mxu0 0.0
          %497 = vmatprep.subr.mxu0 0.0
          %498 = vmatpush1.msra.mxu0 0.0
          %499 = vmatprep.subr.mxu0 0.0
          %500 = vmatpush1.msra.mxu0 0.0
          %501 = vmatprep.subr.mxu0 0.0
          %502 = vmatpush1.msra.mxu0 0.0
          %503 = vmatprep.subr.mxu0 0.0
          %504 = vmatpush1.msra.mxu0 0.0
          %505 = vmatprep.subr.mxu0 0.0
          %506 = vmatpush1.msra.mxu0 0.0
          %507 = vmatprep.subr.mxu0 0.0
          %508 = vmatpush1.msra.mxu0 0.0
          %509 = vmatprep.subr.mxu0 0.0
          %510 = vmatpush1.msra.mxu0 0.0
          %511 = vmatprep.subr.mxu0 0.0
          %512 = vmatpush1.msra.mxu0 0.0
          %513 = vmatprep.subr.mxu0 0.0
          %514 = vmatpush1.msra.mxu0 0.0
          %515 = vmatprep.mubr.f32.mxu0 0.0
          %516 = vmatmul.mubr.f32.gmra.mrb[0].mxu0 %v378
          %v517 = vpop.f32.mrb[0].mxu0
          %v518 = vadd.f32 0.0, %v517
          %v519 = vpop.f32.mrb[0].mxu0
          %520 = vdwg.mxu0
          %v521 = vmax.f32 %v518, 0.0
          %v522 = vadd.f32 %v450, %v521
          %vm523 = vcmask 31744
          %v525 = vsel %vm523, %v368, 0
          %v528 = vsel %vm523, %v369, 0
          %v531 = vsel %vm523, %v370, 0
          %v534 = vsel %vm523, %v371, 0
          %v537 = vsel %vm523, %v372, 0
          %v540 = vsel %vm523, %v373, 0
          %v543 = vsel %vm523, %v374, 0
          %v546 = vsel %vm523, %v375, 0
          %vm548 = vcmask 1043456
          %v550 = vsel %vm548, %v522, 0
          %552 = vmatprep.subr.mxu0 0.0
          %553 = vmatpush1.msra.mxu0 %v550
          %554 = vmatprep.subr.mxu0 0.0
          %555 = vmatpush1.msra.mxu0 0.0
          %556 = vmatprep.subr.mxu0 0.0
          %557 = vmatpush1.msra.mxu0 0.0
          %558 = vmatprep.subr.mxu0 0.0
          %559 = vmatpush1.msra.mxu0 0.0
          %560 = vmatprep.subr.mxu0 0.0
          %561 = vmatpush1.msra.mxu0 0.0
          %562 = vmatprep.subr.mxu0 0.0
          %563 = vmatpush1.msra.mxu0 0.0
          %564 = vmatprep.subr.mxu0 0.0
          %565 = vmatpush1.msra.mxu0 0.0
          %566 = vmatprep.subr.mxu0 0.0
          %567 = vmatpush1.msra.mxu0 0.0
          %568 = vmatprep.subr.mxu0 0.0
          %569 = vmatpush1.msra.mxu0 0.0
          %570 = vmatprep.subr.mxu0 0.0
          %571 = vmatpush1.msra.mxu0 0.0
          %572 = vmatprep.subr.mxu0 0.0
          %573 = vmatpush1.msra.mxu0 0.0
          %574 = vmatprep.subr.mxu0 0.0
          %575 = vmatpush1.msra.mxu0 0.0
          %576 = vmatprep.subr.mxu0 0.0
          %577 = vmatpush1.msra.mxu0 0.0
          %578 = vmatprep.subr.mxu0 0.0
          %579 = vmatpush1.msra.mxu0 0.0
          %580 = vmatprep.subr.mxu0 0.0
          %581 = vmatpush1.msra.mxu0 0.0
          %582 = vmatprep.subr.mxu0 0.0
          %583 = vmatpush1.msra.mxu0 0.0
          %584 = vmatprep.subr.mxu0 0.0
          %585 = vmatpush1.msra.mxu0 0.0
          %586 = vmatprep.subr.mxu0 0.0
          %587 = vmatpush1.msra.mxu0 0.0
          %588 = vmatprep.subr.mxu0 0.0
          %589 = vmatpush1.msra.mxu0 0.0
          %590 = vmatprep.subr.mxu0 0.0
          %591 = vmatpush1.msra.mxu0 0.0
          %592 = vmatprep.subr.mxu0 0.0
          %593 = vmatpush1.msra.mxu0 0.0
          %594 = vmatprep.subr.mxu0 0.0
          %595 = vmatpush1.msra.mxu0 0.0
          %596 = vmatprep.subr.mxu0 0.0
          %597 = vmatpush1.msra.mxu0 0.0
          %598 = vmatprep.subr.mxu0 0.0
          %599 = vmatpush1.msra.mxu0 0.0
          %600 = vmatprep.subr.mxu0 0.0
          %601 = vmatpush1.msra.mxu0 0.0
          %602 = vmatprep.subr.mxu0 0.0
          %603 = vmatpush1.msra.mxu0 0.0
          %604 = vmatprep.subr.mxu0 0.0
          %605 = vmatpush1.msra.mxu0 0.0
          %606 = vmatprep.subr.mxu0 0.0
          %607 = vmatpush1.msra.mxu0 0.0
          %608 = vmatprep.subr.mxu0 0.0
          %609 = vmatpush1.msra.mxu0 0.0
          %610 = vmatprep.subr.mxu0 0.0
          %611 = vmatpush1.msra.mxu0 0.0
          %612 = vmatprep.subr.mxu0 0.0
          %613 = vmatpush1.msra.mxu0 0.0
          %614 = vmatprep.subr.mxu0 0.0
          %615 = vmatpush1.msra.mxu0 0.0
          %616 = vmatprep.mubr.f32.mxu0 0.0
          %617 = vmatmul.mubr.f32.gmra.mrb[0].mxu0 %v525
          %v618 = vpop.f32.mrb[0].mxu0
          %v619 = vadd.f32 0.0, %v618
          %v620 = vpop.f32.mrb[0].mxu0
          %621 = vmatprep.mubr.f32.mxu0 0.0
          %622 = vmatmul.mubr.f32.gmra.mrb[0].mxu0 %v528
          %v623 = vpop.f32.mrb[0].mxu0
          %v624 = vadd.f32 0.0, %v623
          %v625 = vpop.f32.mrb[0].mxu0
          %626 = vmatprep.mubr.f32.mxu0 0.0
          %627 = vmatmul.mubr.f32.gmra.mrb[0].mxu0 %v531
          %v628 = vpop.f32.mrb[0].mxu0
          %v629 = vadd.f32 0.0, %v628
          %v630 = vpop.f32.mrb[0].mxu0
          %631 = vmatprep.mubr.f32.mxu0 0.0
          %632 = vmatmul.mubr.f32.gmra.mrb[0].mxu0 %v534
          %v633 = vpop.f32.mrb[0].mxu0
          %v634 = vadd.f32 0.0, %v633
          %v635 = vpop.f32.mrb[0].mxu0
          %636 = vmatprep.mubr.f32.mxu0 0.0
          %637 = vmatmul.mubr.f32.gmra.mrb[0].mxu0 %v537
          %v638 = vpop.f32.mrb[0].mxu0
          %v639 = vadd.f32 0.0, %v638
          %v640 = vpop.f32.mrb[0].mxu0
          %641 = vmatprep.mubr.f32.mxu0 0.0
          %642 = vmatmul.mubr.f32.gmra.mrb[0].mxu0 %v540
          %v643 = vpop.f32.mrb[0].mxu0
          %v644 = vadd.f32 0.0, %v643
          %v645 = vpop.f32.mrb[0].mxu0
          %646 = vmatprep.mubr.f32.mxu0 0.0
          %647 = vmatmul.mubr.f32.gmra.mrb[0].mxu0 %v543
          %v648 = vpop.f32.mrb[0].mxu0
          %v649 = vadd.f32 0.0, %v648
          %v650 = vpop.f32.mrb[0].mxu0
          %651 = vmatprep.mubr.f32.mxu0 0.0
          %652 = vmatmul.mubr.f32.gmra.mrb[0].mxu0 %v546
          %v653 = vpop.f32.mrb[0].mxu0
          %v654 = vadd.f32 0.0, %v653
          %v655 = vpop.f32.mrb[0].mxu0
          %656 = vdwg.mxu0
          %v657 = vxor.u32 %v619, 2147483648
          %v658 = vxor.u32 %v624, 2147483648
          %v659 = vxor.u32 %v629, 2147483648
          %v660 = vxor.u32 %v634, 2147483648
          %v661 = vxor.u32 %v639, 2147483648
          %v662 = vxor.u32 %v644, 2147483648
          %v663 = vxor.u32 %v649, 2147483648
          %v664 = vxor.u32 %v654, 2147483648
          %v665 = vmul.f32 %v657, 1.442695
          %v666 = vpow.pop %v665
          %v667 = vmul.f32 %v658, 1.442695
          %v668 = vpow.pop %v667
          %v669 = vmul.f32 %v659, 1.442695
          %v670 = vpow.pop %v669
          %v671 = vmul.f32 %v660, 1.442695
          %v672 = vpow.pop %v671
          %v673 = vmul.f32 %v661, 1.442695
          %v674 = vpow.pop %v673
          %v675 = vmul.f32 %v662, 1.442695
          %v676 = vpow.pop %v675
          %v677 = vmul.f32 %v663, 1.442695
          %v678 = vpow.pop %v677
          %v679 = vmul.f32 %v664, 1.442695
          %v680 = vpow.pop %v679
          %v681 = vadd.f32 %v666, 1.0
          %v682 = vadd.f32 %v668, 1.0
          %v683 = vadd.f32 %v670, 1.0
          %v684 = vadd.f32 %v672, 1.0
          %v685 = vadd.f32 %v674, 1.0
          %v686 = vadd.f32 %v676, 1.0
          %v687 = vadd.f32 %v678, 1.0
          %v688 = vadd.f32 %v680, 1.0
          %v689 = vrcp.pop %v681
          %v690 = vmul.f32 1.0, %v689
          %v691 = vrcp.pop %v682
          %v692 = vmul.f32 1.0, %v691
          %v693 = vrcp.pop %v683
          %v694 = vmul.f32 1.0, %v693
          %v695 = vrcp.pop %v684
          %v696 = vmul.f32 1.0, %v695
          %v697 = vrcp.pop %v685
          %v698 = vmul.f32 1.0, %v697
          %v699 = vrcp.pop %v686
          %v700 = vmul.f32 1.0, %v699
          %v701 = vrcp.pop %v687
          %v702 = vmul.f32 1.0, %v701
          %v703 = vrcp.pop %v688
          %v704 = vmul.f32 1.0, %v703
          %vm705 = vcmask 7168
          %706 = vst.msk [vmem:[%s207] sm:$0xff] %vm705, %v690
          %707 = vst.msk [vmem:[%s207 + $0x8] sm:$0xff] %vm705, %v692
          %708 = vst.msk [vmem:[%s207 + $0x10] sm:$0xff] %vm705, %v694
          %709 = vst.msk [vmem:[%s207 + $0x18] sm:$0xff] %vm705, %v696
          %710 = vst.msk [vmem:[%s207 + $0x20] sm:$0xff] %vm705, %v698
          %711 = vst.msk [vmem:[%s207 + $0x28] sm:$0xff] %vm705, %v700
          %712 = vst.msk [vmem:[%s207 + $0x30] sm:$0xff] %vm705, %v702
          %713 = vst.msk [vmem:[%s207 + $0x38] sm:$0xff] %vm705, %v704
        $region44: #{tpu_custom_call.1} parent=31 // pred_fallthru
          _
        %p714 = scmp.lt.s32.totalorder %s21, 1
        %s715 = scalar_select %p714, %s21, 1
        %s716 = smul.addr %s715, 8
        %s717 = smul.addr %s716, 8
        %s718 = scalar_lea.vmem %s3, %s717
        // Predicated region
        $region45: #{tpu_custom_call.1} parent=31 // pred_check
          %p719 = pneg %p117
        $region46: #{tpu_custom_call.1} parent=31 // pred_check_branch
          %721 = sbr.rel (%p719) target = $region48
        $region47: #{tpu_custom_call.1} parent=31 // pred_region
          _
        $region48: #{tpu_custom_call.1} parent=31 // pred_fallthru
          _
      $region32: #{tpu_custom_call.1} parent=5 // pred_fallthru
        _
      %p722 = scmp.le.s32.totalorder 2, %s12
      // Predicated region
      $region49: #{tpu_custom_call.1} parent=5 // pred_check
        %p723 = pneg %p722
      $region50: #{tpu_custom_call.1} parent=5 // pred_check_branch
        %725 = sbr.rel (%p723) target = $region52
      $region51: #{tpu_custom_call.1} parent=5 // pred_region
        %s726 = ssub.s32 %s12, 2
        // Predicated region
        $region53: #{tpu_custom_call.1} parent=51 // pred_check
          %p727 = pneg %p123
        $region54: #{tpu_custom_call.1} parent=51 // pred_check_branch
          %729 = sbr.rel (%p727) target = $region56
        $region55: #{tpu_custom_call.1} parent=51 // pred_region
          %p730 = scmp.lt.s32.totalorder %s23, 1
          %s731 = scalar_select %p730, %s23, 1
          %s732 = smul.addr %s731, 8
          %s733 = smul.addr %s732, 8
          %s734 = scalar_lea.vmem %s3, %s733
        $region56: #{tpu_custom_call.1} parent=51 // pred_fallthru
          _
      $region52: #{tpu_custom_call.1} parent=5 // pred_fallthru
        _
    $region6: #{tpu_custom_call.1} parent=1 // loop_footer
      %s16 = sadd.s32 1, %s12
    $region7: #{tpu_custom_call.1} parent=1 // loop_footer_branch
      %11 = sbr.rel target = $region3
    $region8: #{tpu_custom_call.1} parent=1 // loop_exit
      _
    %735 = vsyncpa [#allocation5], 1
    %s736 = scalar_lea.sflag [#allocation5], 1
    %737 = vsyncpa %s736, 1

</llo_original>
